<compile_context>
chip_gen: v7x
topology: tpu7x:2x2x1
jax: 0.10.0
libtpu: 0.0.40
codegen_flags: <defaults>
</compile_context>

<pallas_src>
import functools

import jax
import jax.numpy as jnp
from jax.experimental import pallas as pl
from jax.experimental.pallas import tpu as pltpu

LANE = 128   # TPU lane width (last-dim tile); also the padded action width
SUB = 8      # f32 sublane tile (second-to-last-dim tile)


def _round_up(x, m):
    return (x + m - 1) // m * m


# --------------------------------------------------------------------- kernel helpers
def _gru_update(gx, gh, h, b_hn, hd):
    """PyTorch GRUCell gate math; gates packed as r|z|n in contiguous H-lane segments.

    gx = W_ix x + (b_i + b_h merged for r,z; b_in for n);  gh = W_hh h (no bias).
    """
    s = gx + gh
    r = jax.nn.sigmoid(s[:, 0:hd])
    z = jax.nn.sigmoid(s[:, hd:2 * hd])
    n = jnp.tanh(gx[:, 2 * hd:3 * hd] + r * (gh[:, 2 * hd:3 * hd] + b_hn))
    return (1.0 - z) * n + z * h


def _action_head(h, w_out, b_out):
    return jnp.tanh(jnp.dot(h.astype(jnp.bfloat16), w_out,
                            preferred_element_type=jnp.float32) + b_out)


# --------------------------------------------------------------------------- kernels
def _step_kernel(x_ref, h_ref, w_enc_ref, b_enc_ref, w_x3_ref, b_x3_ref,
                 w_h3_ref, b_hn_ref, w_out_ref, b_out_ref,
                 ac_ref, h_out_ref, *, hidden_dim):
    hd = hidden_dim
    # Fused image+state encoder (block-diagonal weight); bf16 MXU, f32 accumulate.
    enc = jnp.maximum(
        jnp.dot(x_ref[...], w_enc_ref[...],
                preferred_element_type=jnp.float32) + b_enc_ref[...], 0.0)
    gx = jnp.dot(enc.astype(jnp.bfloat16), w_x3_ref[...],
                 preferred_element_type=jnp.float32) + b_x3_ref[...]
    h = h_ref[...]
    gh = jnp.dot(h.astype(jnp.bfloat16), w_h3_ref[...],
                 preferred_element_type=jnp.float32)
    h_new = _gru_update(gx, gh, h, b_hn_ref[...], hd)
    ac_ref[...] = _action_head(h_new, w_out_ref[...], b_out_ref[...])
    h_out_ref[...] = h_new


def _rollout_kernel(x_ref, h0_ref, w_enc_ref, b_enc_ref, w_x3_ref, b_x3_ref,
                    w_h3_ref, b_hn_ref, w_out_ref, b_out_ref,
                    ac_ref, h_out_ref, *, hidden_dim, b_pad, steps):
    hd = hidden_dim

    # --- Prologue: non-recurrent matmuls batched over all T steps (M = steps*b_pad).
    enc = jnp.maximum(
        jnp.dot(x_ref[...], w_enc_ref[...],
                preferred_element_type=jnp.float32) + b_enc_ref[...], 0.0)
    gx_all = jnp.dot(enc.astype(jnp.bfloat16), w_x3_ref[...],
                     preferred_element_type=jnp.float32) + b_x3_ref[...]

    w_h3 = w_h3_ref[...]
    b_hn = b_hn_ref[...]
    w_out = w_out_ref[...]
    b_out = b_out_ref[...]

    # --- Recurrence: only the small h-side matmul + gate math + action head per step.
    # `steps` is small and static, so this fully unrolls at trace time with static,
    # sublane-aligned slices (b_pad is a multiple of the f32 sublane tile).
    h = h0_ref[...]
    for t in range(steps):
        gx_t = gx_all[t * b_pad:(t + 1) * b_pad, :]
        gh = jnp.dot(h.astype(jnp.bfloat16), w_h3,
                     preferred_element_type=jnp.float32)
        h = _gru_update(gx_t, gh, h, b_hn, hd)
        ac_ref[t] = _action_head(h, w_out, b_out)          # lane-dense (b_pad, 128)
    h_out_ref[...] = h


# --------------------------------------------------------------------------- params
def make_params(key, img_dim, state_dim, feat_dim, hidden_dim, action_dim):
    """Fused, packed kernel operands (init ~ U(+-1/sqrt(fan_in)), like PyTorch)."""
    assert action_dim <= LANE

    def lin(k, fan_in, shape):
        scale = 1.0 / jnp.sqrt(jnp.float32(fan_in))
        return jax.random.uniform(k, shape, jnp.float32, -scale, scale)

    x_dim = 2 * feat_dim                        # fused encoder output width
    k_in = _round_up(img_dim + state_dim, 16)   # bf16 sublane tile for w_enc rows

    ks = jax.random.split(key, 15)
    w_img = lin(ks[0], img_dim, (img_dim, feat_dim))
    b_img = lin(ks[1], img_dim, (feat_dim,))
    w_st = lin(ks[2], state_dim, (state_dim, feat_dim))
    b_st = lin(ks[3], state_dim, (feat_dim,))
    w_xr = lin(ks[4], x_dim, (x_dim, hidden_dim))
    w_hr = lin(ks[5], hidden_dim, (hidden_dim, hidden_dim))
    b_r = lin(ks[6], x_dim, (hidden_dim,))             # merged b_ir + b_hr
    w_xz = lin(ks[7], x_dim, (x_dim, hidden_dim))
    w_hz = lin(ks[8], hidden_dim, (hidden_dim, hidden_dim))
    b_z = lin(ks[9], x_dim, (hidden_dim,))             # merged b_iz + b_hz
    w_xn = lin(ks[10], x_dim, (x_dim, hidden_dim))
    w_hn = lin(ks[11], hidden_dim, (hidden_dim, hidden_dim))
    b_xn = lin(ks[12], x_dim, (hidden_dim,))
    b_hn = lin(ks[13], hidden_dim, (hidden_dim,))
    w_out = lin(ks[14], hidden_dim, (hidden_dim, action_dim))
    b_out = jnp.zeros((action_dim,), jnp.float32)

    # Fused encoder: block-diagonal (k_in, 2F); image -> cols [0,F), state -> [F,2F).
    w_enc = jnp.zeros((k_in, x_dim), jnp.float32)
    w_enc = w_enc.at[:img_dim, :feat_dim].set(w_img)
    w_enc = w_enc.at[img_dim:img_dim + state_dim, feat_dim:].set(w_st)
    b_enc = jnp.concatenate([b_img, b_st])[None, :]            # (1, 2F)

    # Fused GRU gate weights packed into contiguous H-lane segments: r | z | n.
    w_x3 = jnp.concatenate([w_xr, w_xz, w_xn], axis=1)         # (2F, 3H)
    w_h3 = jnp.concatenate([w_hr, w_hz, w_hn], axis=1)         # (H, 3H)
    b_x3 = jnp.concatenate([b_r, b_z, b_xn])[None, :]          # (1, 3H)
    b_hn_p = b_hn[None, :]                                     # (1, H)

    # Action head: output lane-padded to 128 so per-step action stores are lane-dense.
    w_out_p = jnp.zeros((hidden_dim, LANE), jnp.float32).at[:, :action_dim].set(w_out)
    b_out_p = jnp.zeros((1, LANE), jnp.float32).at[0, :action_dim].set(b_out)

    return dict(
        w_enc=w_enc.astype(jnp.bfloat16), b_enc=b_enc,
        w_x3=w_x3.astype(jnp.bfloat16), b_x3=b_x3,
        w_h3=w_h3.astype(jnp.bfloat16), b_hn=b_hn_p,
        w_out=w_out_p.astype(jnp.bfloat16), b_out=b_out_p,
    )


# --------------------------------------------------------------------------- wrappers
def _pack_inputs(image, robot_state, k_in):
    """NCHW image + robot_state -> batch-padded bf16 fused-encoder input block."""
    B = image.shape[0]
    img = image.reshape(B, -1).astype(jnp.float32)
    st = robot_state.astype(jnp.float32)
    b_pad = _round_up(max(B, SUB), SUB)
    x = jnp.zeros((b_pad, k_in), jnp.float32)
    x = x.at[:B, :img.shape[1]].set(img)
    x = x.at[:B, img.shape[1]:img.shape[1] + st.shape[1]].set(st)
    return x.astype(jnp.bfloat16)          # bf16 halves the HBM->VMEM input DMA


def _weight_operands(params):
    return (params["w_enc"], params["b_enc"], params["w_x3"], params["b_x3"],
            params["w_h3"], params["b_hn"], params["w_out"], params["b_out"])


@functools.partial(jax.jit, static_argnames=("action_dim",), donate_argnames=("h_pad",))
def policy_step(params, image, robot_state, h_pad, *, action_dim):
    """Single recurrent step: (action (B, A), new hidden (b_pad, H))."""
    B = image.shape[0]
    k_in = params["w_enc"].shape[0]
    hd = params["w_h3"].shape[0]
    x = _pack_inputs(image, robot_state, k_in)
    b_pad = x.shape[0]

    vmem = pl.BlockSpec(memory_space=pltpu.MemorySpace.VMEM)
    operands = (x, h_pad) + _weight_operands(params)
    ac_pad, h_new = pl.pallas_call(
        functools.partial(_step_kernel, hidden_dim=hd),
        out_shape=(
            jax.ShapeDtypeStruct((b_pad, LANE), jnp.float32),
            jax.ShapeDtypeStruct((b_pad, hd), jnp.float32),
        ),
        in_specs=[vmem] * len(operands),
        out_specs=(vmem, vmem),
        input_output_aliases={1: 1},   # carried hidden reuses its (donated) HBM buffer
    )(*operands)
    return ac_pad[:B, :action_dim], h_new


@functools.partial(jax.jit, static_argnames=("action_dim",))
def policy_rollout(params, images, robot_states, h0, *, action_dim):
    """Fused T-step rollout in ONE kernel invocation: batched encoder / x-gate
    prologue (M = T*b_pad rows) + fully-unrolled serial recurrence; weights DMA'd once."""
    T, B = images.shape[0], images.shape[1]
    k_in = params["w_enc"].shape[0]
    hd = params["w_h3"].shape[0]
    x = jax.vmap(lambda im, st: _pack_inputs(im, st, k_in))(images, robot_states)
    b_pad = x.shape[1]
    x_flat = x.reshape(T * b_pad, k_in)          # (T*b_pad, k_in) bf16

    vmem = pl.BlockSpec(memory_space=pltpu.MemorySpace.VMEM)
    operands = (x_flat, h0) + _weight_operands(params)
    ac_pad, h_last = pl.pallas_call(
        functools.partial(_rollout_kernel, hidden_dim=hd, b_pad=b_pad, steps=T),
        out_shape=(
            jax.ShapeDtypeStruct((T, b_pad, LANE), jnp.float32),
            jax.ShapeDtypeStruct((b_pad, hd), jnp.float32),
        ),
        in_specs=[vmem] * len(operands),
        out_specs=(vmem, vmem),
    )(*operands)
    return ac_pad[:, :B, :action_dim], h_last


class RNNAgent:
    """Mirrors the PyTorch RNNAgent: stateful recurrent memory across forward calls."""

    def __init__(self, params, action_dim, batch_size):
        self._params = params
        self._action_dim = action_dim
        self._b_pad = _round_up(max(batch_size, SUB), SUB)
        self._hidden = params["w_h3"].shape[0]
        self._memory = None

    def reset(self):
        self._memory = None

    def forward(self, image, robot_state):
        if self._memory is None:
            self._memory = jnp.zeros((self._b_pad, self._hidden), jnp.float32)
        ac, self._memory = policy_step(self._params, image, robot_state,
                                       self._memory, action_dim=self._action_dim)
        return ac

    __call__ = forward


if __name__ == "__main__":
    B, C, Himg, Wimg = 2, 4, 16, 16
    STATE_DIM = 8
    FEAT_DIM = 32
    HIDDEN_DIM = 32
    ACTION_DIM = 8
    T = 8

    key = jax.random.PRNGKey(0)
    k_img, k_st, k_par = jax.random.split(key, 3)
    params = make_params(k_par, C * Himg * Wimg, STATE_DIM, FEAT_DIM, HIDDEN_DIM,
                         ACTION_DIM)

    # Stateful per-step agent (matches the PyTorch RNNAgent interface).
    image = jax.random.normal(k_img, (B, C, Himg, Wimg), jnp.float32)
    robot_state = jax.random.normal(k_st, (B, STATE_DIM), jnp.float32)
    agent = RNNAgent(params, ACTION_DIM, B)
    agent.reset()
    ac1 = agent.forward(image, robot_state)
    ac2 = agent.forward(image, robot_state)       # uses carried memory
    jax.block_until_ready(ac2)
    assert ac1.shape == (B, ACTION_DIM) and ac2.shape == (B, ACTION_DIM)

    # Fused T-step rollout in one kernel invocation (weights DMA'd once, hidden
    # carried on-chip, encoder/x-gate matmuls batched over all T steps).
    images = jax.random.normal(k_img, (T, B, C, Himg, Wimg), jnp.float32)
    states = jax.random.normal(k_st, (T, B, STATE_DIM), jnp.float32)
    h0 = jnp.zeros((agent._b_pad, HIDDEN_DIM), jnp.float32)
    acs, h_T = policy_rollout(params, images, states, h0, action_dim=ACTION_DIM)
    jax.block_until_ready(acs)
    assert acs.shape == (T, B, ACTION_DIM)

    # Cross-check: fused rollout == sequential stepping through the same weights.
    agent.reset()
    for t in range(T):
        ac_t = agent.forward(images[t], states[t])
        assert jnp.allclose(ac_t, acs[t], atol=1e-4), f"mismatch at step {t}"

    print("KERNEL_OK")
</pallas_src>

<mosaic_0001>
module attributes {stable_mosaic.version = 11 : i64} {
  func.func @_step_kernel(%arg0: memref<8x1040xbf16, #tpu.memory_space<vmem>>, %arg1: memref<8x32xf32, #tpu.memory_space<vmem>>, %arg2: memref<1040x64xbf16, #tpu.memory_space<vmem>>, %arg3: memref<1x64xf32, #tpu.memory_space<vmem>>, %arg4: memref<64x96xbf16, #tpu.memory_space<vmem>>, %arg5: memref<1x96xf32, #tpu.memory_space<vmem>>, %arg6: memref<32x96xbf16, #tpu.memory_space<vmem>>, %arg7: memref<1x32xf32, #tpu.memory_space<vmem>>, %arg8: memref<32x128xbf16, #tpu.memory_space<vmem>>, %arg9: memref<1x128xf32, #tpu.memory_space<vmem>>, %arg10: memref<8x128xf32, #tpu.memory_space<vmem>>, %arg11: memref<8x32xf32, #tpu.memory_space<vmem>>) attributes {dimension_semantics = [], scalar_prefetch = 0 : i64, scratch_operands = 0 : i64, tpu.core_type = #tpu.core_type<tc>} {
    %c0 = arith.constant 0 : index
    %c0_0 = arith.constant 0 : index
    %0 = vector.load %arg0[%c0, %c0_0] : memref<8x1040xbf16, #tpu.memory_space<vmem>>, vector<8x1040xbf16>
    %c0_1 = arith.constant 0 : index
    %c0_2 = arith.constant 0 : index
    %1 = vector.load %arg2[%c0_1, %c0_2] : memref<1040x64xbf16, #tpu.memory_space<vmem>>, vector<1040x64xbf16>
    %cst = arith.constant dense<0.000000e+00> : vector<8x64xf32>
    %2 = tpu.matmul %0, %1, %cst {dimension_numbers = #tpu.dot_dimension_numbers<[1], [0], [0], [1], [0, 0, 1, 1], [], []>} : vector<8x1040xbf16>, vector<1040x64xbf16>, vector<8x64xf32> -> vector<8x64xf32>
    %c0_3 = arith.constant 0 : index
    %c0_4 = arith.constant 0 : index
    %3 = vector.load %arg3[%c0_3, %c0_4] : memref<1x64xf32, #tpu.memory_space<vmem>>, vector<1x64xf32>
    %4 = vector.broadcast %3 : vector<1x64xf32> to vector<8x64xf32>
    %5 = arith.addf %2, %4 : vector<8x64xf32>
    %cst_5 = arith.constant 0.000000e+00 : f32
    %6 = vector.broadcast %cst_5 : f32 to vector<8x64xf32>
    %7 = arith.maximumf %5, %6 : vector<8x64xf32>
    %8 = arith.truncf %7 : vector<8x64xf32> to vector<8x64xbf16>
    %c0_6 = arith.constant 0 : index
    %c0_7 = arith.constant 0 : index
    %9 = vector.load %arg4[%c0_6, %c0_7] : memref<64x96xbf16, #tpu.memory_space<vmem>>, vector<64x96xbf16>
    %cst_8 = arith.constant dense<0.000000e+00> : vector<8x96xf32>
    %10 = tpu.matmul %8, %9, %cst_8 {dimension_numbers = #tpu.dot_dimension_numbers<[1], [0], [0], [1], [0, 0, 1, 1], [], []>} : vector<8x64xbf16>, vector<64x96xbf16>, vector<8x96xf32> -> vector<8x96xf32>
    %c0_9 = arith.constant 0 : index
    %c0_10 = arith.constant 0 : index
    %11 = vector.load %arg5[%c0_9, %c0_10] : memref<1x96xf32, #tpu.memory_space<vmem>>, vector<1x96xf32>
    %12 = vector.broadcast %11 : vector<1x96xf32> to vector<8x96xf32>
    %13 = arith.addf %10, %12 : vector<8x96xf32>
    %c0_11 = arith.constant 0 : index
    %c0_12 = arith.constant 0 : index
    %14 = vector.load %arg1[%c0_11, %c0_12] : memref<8x32xf32, #tpu.memory_space<vmem>>, vector<8x32xf32>
    %15 = arith.truncf %14 : vector<8x32xf32> to vector<8x32xbf16>
    %c0_13 = arith.constant 0 : index
    %c0_14 = arith.constant 0 : index
    %16 = vector.load %arg6[%c0_13, %c0_14] : memref<32x96xbf16, #tpu.memory_space<vmem>>, vector<32x96xbf16>
    %cst_15 = arith.constant dense<0.000000e+00> : vector<8x96xf32>
    %17 = tpu.matmul %15, %16, %cst_15 {dimension_numbers = #tpu.dot_dimension_numbers<[1], [0], [0], [1], [0, 0, 1, 1], [], []>} : vector<8x32xbf16>, vector<32x96xbf16>, vector<8x96xf32> -> vector<8x96xf32>
    %c0_16 = arith.constant 0 : index
    %c0_17 = arith.constant 0 : index
    %18 = vector.load %arg7[%c0_16, %c0_17] : memref<1x32xf32, #tpu.memory_space<vmem>>, vector<1x32xf32>
    %19 = arith.addf %13, %17 : vector<8x96xf32>
    %20 = vector.extract_strided_slice %19 {offsets = [0, 0], sizes = [8, 32], strides = [1, 1]} : vector<8x96xf32> to vector<8x32xf32>
    %21 = arith.negf %20 : vector<8x32xf32>
    %22 = math.exp %21 : vector<8x32xf32>
    %cst_18 = arith.constant 1.000000e+00 : f32
    %23 = vector.broadcast %cst_18 : f32 to vector<8x32xf32>
    %24 = arith.addf %23, %22 : vector<8x32xf32>
    %25 = arith.divf %23, %24 : vector<8x32xf32>
    %26 = vector.extract_strided_slice %19 {offsets = [0, 32], sizes = [8, 32], strides = [1, 1]} : vector<8x96xf32> to vector<8x32xf32>
    %27 = arith.negf %26 : vector<8x32xf32>
    %28 = math.exp %27 : vector<8x32xf32>
    %cst_19 = arith.constant 1.000000e+00 : f32
    %29 = vector.broadcast %cst_19 : f32 to vector<8x32xf32>
    %30 = arith.addf %29, %28 : vector<8x32xf32>
    %31 = arith.divf %29, %30 : vector<8x32xf32>
    %32 = vector.extract_strided_slice %13 {offsets = [0, 64], sizes = [8, 32], strides = [1, 1]} : vector<8x96xf32> to vector<8x32xf32>
    %33 = vector.extract_strided_slice %17 {offsets = [0, 64], sizes = [8, 32], strides = [1, 1]} : vector<8x96xf32> to vector<8x32xf32>
    %34 = vector.broadcast %18 : vector<1x32xf32> to vector<8x32xf32>
    %35 = arith.addf %33, %34 : vector<8x32xf32>
    %36 = arith.mulf %25, %35 : vector<8x32xf32>
    %37 = arith.addf %32, %36 : vector<8x32xf32>
    %38 = math.tanh %37 : vector<8x32xf32>
    %cst_20 = arith.constant 1.000000e+00 : f32
    %39 = vector.broadcast %cst_20 : f32 to vector<8x32xf32>
    %40 = arith.subf %39, %31 : vector<8x32xf32>
    %41 = arith.mulf %40, %38 : vector<8x32xf32>
    %42 = arith.mulf %31, %14 : vector<8x32xf32>
    %43 = arith.addf %41, %42 : vector<8x32xf32>
    %c0_21 = arith.constant 0 : index
    %c0_22 = arith.constant 0 : index
    %44 = vector.load %arg8[%c0_21, %c0_22] : memref<32x128xbf16, #tpu.memory_space<vmem>>, vector<32x128xbf16>
    %c0_23 = arith.constant 0 : index
    %c0_24 = arith.constant 0 : index
    %45 = vector.load %arg9[%c0_23, %c0_24] : memref<1x128xf32, #tpu.memory_space<vmem>>, vector<1x128xf32>
    %46 = arith.truncf %43 : vector<8x32xf32> to vector<8x32xbf16>
    %cst_25 = arith.constant dense<0.000000e+00> : vector<8x128xf32>
    %47 = tpu.matmul %46, %44, %cst_25 {dimension_numbers = #tpu.dot_dimension_numbers<[1], [0], [0], [1], [0, 0, 1, 1], [], []>} : vector<8x32xbf16>, vector<32x128xbf16>, vector<8x128xf32> -> vector<8x128xf32>
    %48 = vector.broadcast %45 : vector<1x128xf32> to vector<8x128xf32>
    %49 = arith.addf %47, %48 : vector<8x128xf32>
    %50 = math.tanh %49 : vector<8x128xf32>
    %c0_26 = arith.constant 0 : index
    %c0_27 = arith.constant 0 : index
    %51 = vector.load %arg10[%c0_26, %c0_27] : memref<8x128xf32, #tpu.memory_space<vmem>>, vector<8x128xf32>
    tpu.vector_store %arg10[%c0_26, %c0_27], %50 {strides = array<i32>} : memref<8x128xf32, #tpu.memory_space<vmem>>, vector<8x128xf32>,
    %c0_28 = arith.constant 0 : index
    %c0_29 = arith.constant 0 : index
    %52 = vector.load %arg11[%c0_28, %c0_29] : memref<8x32xf32, #tpu.memory_space<vmem>>, vector<8x32xf32>
    tpu.vector_store %arg11[%c0_28, %c0_29], %43 {strides = array<i32>} : memref<8x32xf32, #tpu.memory_space<vmem>>, vector<8x32xf32>,
    return
  }
}

</mosaic_0001>

<llo_original>
// kernel: policy_step.1
$region0: #{policy_step.1}
  #allocation0 [shape = 'u32[]', space=smem, size = 0x4, offset = 0x4, fixed_abs, tag = 'smem constant byte address 0x4 - core index']
  #allocation1 [shape = 'u32[144,128]{1,0:T(1,128)}', space=vmem, size = 0x12000, scoped, tag = 'internal scratch']
  %s0 = inlined_call_operand.vmem [shape: bf16[8,1040], index: 0, kind: input, shape index: {}]
  %s1 = inlined_call_operand.vmem [shape: f32[8,32], index: 1, kind: input, shape index: {}, may-alias: {1,11}]
  %s2 = inlined_call_operand.vmem [shape: bf16[1040,64], index: 2, kind: input, shape index: {}]
  %s3 = inlined_call_operand.vmem [shape: f32[1,64], index: 3, kind: input, shape index: {}]
  %s4 = inlined_call_operand.vmem [shape: bf16[64,96], index: 4, kind: input, shape index: {}]
  %s5 = inlined_call_operand.vmem [shape: f32[1,96], index: 5, kind: input, shape index: {}]
  %s6 = inlined_call_operand.vmem [shape: bf16[32,96], index: 6, kind: input, shape index: {}]
  %s7 = inlined_call_operand.vmem [shape: f32[1,32], index: 7, kind: input, shape index: {}]
  %s8 = inlined_call_operand.vmem [shape: bf16[32,128], index: 8, kind: input, shape index: {}]
  %s9 = inlined_call_operand.vmem [shape: f32[1,128], index: 9, kind: input, shape index: {}]
  %s10 = inlined_call_operand.vmem [shape: f32[8,128], index: 10, kind: output, shape index: {0}]
  %s11 = inlined_call_operand.vmem [shape: f32[8,32], index: 11, kind: output, shape index: {1}, may-alias: {1,11}]
  %12 = xla_tuple %s10, %s11
  %s13 = sld [smem:[#allocation0]]
  $region58: #{policy_step.1} parent=0
    _
  %s15 = ssub.s32 1, %s13
  %s16 = scalar_select 0, %s15, %s13
  // Predicated region
  $region2: #{policy_step.1} parent=0 // pred_check
    _
  $region3: #{policy_step.1} parent=0 // pred_check_branch
    %18 = sbr.rel (0) target = $region5
  $region4: #{policy_step.1} parent=0 // pred_region
    _
  $region5: #{policy_step.1} parent=0 // pred_fallthru
    _
  // Predicated region
  $region6: #{policy_step.1} parent=0 // pred_check
    _
  $region7: #{policy_step.1} parent=0 // pred_check_branch
    %20 = sbr.rel (0) target = $region9
  $region8: #{policy_step.1} parent=0 // pred_region
    _
  $region9: #{policy_step.1} parent=0 // pred_fallthru
    _
  // Predicated region
  $region10: #{policy_step.1} parent=0 // pred_check
    _
  $region11: #{policy_step.1} parent=0 // pred_check_branch
    %22 = sbr.rel (0) target = $region13
  $region12: #{policy_step.1} parent=0 // pred_region
    _
  $region13: #{policy_step.1} parent=0 // pred_fallthru
    _
  // Predicated region
  $region14: #{policy_step.1} parent=0 // pred_check
    _
  $region15: #{policy_step.1} parent=0 // pred_check_branch
    %24 = sbr.rel (0) target = $region17
  $region16: #{policy_step.1} parent=0 // pred_region
    _
  $region17: #{policy_step.1} parent=0 // pred_fallthru
    _
  // Predicated region
  $region18: #{policy_step.1} parent=0 // pred_check
    _
  $region19: #{policy_step.1} parent=0 // pred_check_branch
    %26 = sbr.rel (0) target = $region21
  $region20: #{policy_step.1} parent=0 // pred_region
    _
  $region21: #{policy_step.1} parent=0 // pred_fallthru
    _
  // Predicated region
  $region22: #{policy_step.1} parent=0 // pred_check
    _
  $region23: #{policy_step.1} parent=0 // pred_check_branch
    %28 = sbr.rel (0) target = $region25
  $region24: #{policy_step.1} parent=0 // pred_region
    _
  $region25: #{policy_step.1} parent=0 // pred_fallthru
    _
  // Predicated region
  $region26: #{policy_step.1} parent=0 // pred_check
    _
  $region27: #{policy_step.1} parent=0 // pred_check_branch
    %30 = sbr.rel (0) target = $region29
  $region28: #{policy_step.1} parent=0 // pred_region
    _
  $region29: #{policy_step.1} parent=0 // pred_fallthru
    _
  // Predicated region
  $region30: #{policy_step.1} parent=0 // pred_check
    _
  $region31: #{policy_step.1} parent=0 // pred_check_branch
    %32 = sbr.rel (0) target = $region33
  $region32: #{policy_step.1} parent=0 // pred_region
    _
  $region33: #{policy_step.1} parent=0 // pred_fallthru
    _
  // Predicated region
  $region34: #{policy_step.1} parent=0 // pred_check
    _
  $region35: #{policy_step.1} parent=0 // pred_check_branch
    %34 = sbr.rel (0) target = $region37
  $region36: #{policy_step.1} parent=0 // pred_region
    _
  $region37: #{policy_step.1} parent=0 // pred_fallthru
    _
  // Predicated region
  $region38: #{policy_step.1} parent=0 // pred_check
    _
  $region39: #{policy_step.1} parent=0 // pred_check_branch
    %36 = sbr.rel (0) target = $region41
  $region40: #{policy_step.1} parent=0 // pred_region
    _
  $region41: #{policy_step.1} parent=0 // pred_fallthru
    _
  %v38 = vld [vmem:[%s0] sm:$0xff]
  %v39 = vld [vmem:[%s0 + $0x8] sm:$0xff]
  %v40 = vld [vmem:[%s0 + $0x10] sm:$0xff]
  %v41 = vld [vmem:[%s0 + $0x18] sm:$0xff]
  %v42 = vld [vmem:[%s0 + $0x20] sm:$0xf]
  %v43 = vld [vmem:[%s2] sm:$0xf]
  %v44 = vld [vmem:[%s2 + $0x4] sm:$0xf]
  %v45 = vld [vmem:[%s2 + $0x8] sm:$0xf]
  %v46 = vld [vmem:[%s2 + $0xc] sm:$0xf]
  %v47 = vld [vmem:[%s2 + $0x10] sm:$0xf]
  %v48 = vld [vmem:[%s2 + $0x14] sm:$0xf]
  %v49 = vld [vmem:[%s2 + $0x18] sm:$0xf]
  %v50 = vld [vmem:[%s2 + $0x1c] sm:$0xf]
  %v51 = vld [vmem:[%s2 + $0x20] sm:$0xf]
  %v52 = vld [vmem:[%s2 + $0x24] sm:$0xf]
  %v53 = vld [vmem:[%s2 + $0x28] sm:$0xf]
  %v54 = vld [vmem:[%s2 + $0x2c] sm:$0xf]
  %v55 = vld [vmem:[%s2 + $0x30] sm:$0xf]
  %v56 = vld [vmem:[%s2 + $0x34] sm:$0xf]
  %v57 = vld [vmem:[%s2 + $0x38] sm:$0xf]
  %v58 = vld [vmem:[%s2 + $0x3c] sm:$0xf]
  %v59 = vld [vmem:[%s2 + $0x40] sm:$0xf]
  %v60 = vld [vmem:[%s2 + $0x44] sm:$0xf]
  %v61 = vld [vmem:[%s2 + $0x48] sm:$0xf]
  %v62 = vld [vmem:[%s2 + $0x4c] sm:$0xf]
  %v63 = vld [vmem:[%s2 + $0x50] sm:$0xf]
  %v64 = vld [vmem:[%s2 + $0x54] sm:$0xf]
  %v65 = vld [vmem:[%s2 + $0x58] sm:$0xf]
  %v66 = vld [vmem:[%s2 + $0x5c] sm:$0xf]
  %v67 = vld [vmem:[%s2 + $0x60] sm:$0xf]
  %v68 = vld [vmem:[%s2 + $0x64] sm:$0xf]
  %v69 = vld [vmem:[%s2 + $0x68] sm:$0xf]
  %v70 = vld [vmem:[%s2 + $0x6c] sm:$0xf]
  %v71 = vld [vmem:[%s2 + $0x70] sm:$0xf]
  %v72 = vld [vmem:[%s2 + $0x74] sm:$0xf]
  %v73 = vld [vmem:[%s2 + $0x78] sm:$0xf]
  %v74 = vld [vmem:[%s2 + $0x7c] sm:$0xf]
  %v75 = vld [vmem:[%s2 + $0x80] sm:$0xf]
  %v76 = vld [vmem:[%s2 + $0x84] sm:$0xf]
  %v77 = vld [vmem:[%s2 + $0x88] sm:$0xf]
  %v78 = vld [vmem:[%s2 + $0x8c] sm:$0xf]
  %v79 = vld [vmem:[%s2 + $0x90] sm:$0xf]
  %v80 = vld [vmem:[%s2 + $0x94] sm:$0xf]
  %v81 = vld [vmem:[%s2 + $0x98] sm:$0xf]
  %v82 = vld [vmem:[%s2 + $0x9c] sm:$0xf]
  %v83 = vld [vmem:[%s2 + $0xa0] sm:$0xf]
  %v84 = vld [vmem:[%s2 + $0xa4] sm:$0xf]
  %v85 = vld [vmem:[%s2 + $0xa8] sm:$0xf]
  %v86 = vld [vmem:[%s2 + $0xac] sm:$0xf]
  %v87 = vld [vmem:[%s2 + $0xb0] sm:$0xf]
  %v88 = vld [vmem:[%s2 + $0xb4] sm:$0xf]
  %v89 = vld [vmem:[%s2 + $0xb8] sm:$0xf]
  %v90 = vld [vmem:[%s2 + $0xbc] sm:$0xf]
  %v91 = vld [vmem:[%s2 + $0xc0] sm:$0xf]
  %v92 = vld [vmem:[%s2 + $0xc4] sm:$0xf]
  %v93 = vld [vmem:[%s2 + $0xc8] sm:$0xf]
  %v94 = vld [vmem:[%s2 + $0xcc] sm:$0xf]
  %v95 = vld [vmem:[%s2 + $0xd0] sm:$0xf]
  %v96 = vld [vmem:[%s2 + $0xd4] sm:$0xf]
  %v97 = vld [vmem:[%s2 + $0xd8] sm:$0xf]
  %v98 = vld [vmem:[%s2 + $0xdc] sm:$0xf]
  %v99 = vld [vmem:[%s2 + $0xe0] sm:$0xf]
  %v100 = vld [vmem:[%s2 + $0xe4] sm:$0xf]
  %v101 = vld [vmem:[%s2 + $0xe8] sm:$0xf]
  %v102 = vld [vmem:[%s2 + $0xec] sm:$0xf]
  %v103 = vld [vmem:[%s2 + $0xf0] sm:$0xf]
  %v104 = vld [vmem:[%s2 + $0xf4] sm:$0xf]
  %v105 = vld [vmem:[%s2 + $0xf8] sm:$0xf]
  %v106 = vld [vmem:[%s2 + $0xfc] sm:$0xf]
  %v107 = vld [vmem:[%s2 + $0x100] sm:$0xf]
  %v108 = vld [vmem:[%s2 + $0x104] sm:$0xf]
  %v109 = vld [vmem:[%s2 + $0x108] sm:$0xf]
  %v110 = vld [vmem:[%s2 + $0x10c] sm:$0xf]
  %v111 = vld [vmem:[%s2 + $0x110] sm:$0xf]
  %v112 = vld [vmem:[%s2 + $0x114] sm:$0xf]
  %v113 = vld [vmem:[%s2 + $0x118] sm:$0xf]
  %v114 = vld [vmem:[%s2 + $0x11c] sm:$0xf]
  %v115 = vld [vmem:[%s2 + $0x120] sm:$0xf]
  %v116 = vld [vmem:[%s2 + $0x124] sm:$0xf]
  %v117 = vld [vmem:[%s2 + $0x128] sm:$0xf]
  %v118 = vld [vmem:[%s2 + $0x12c] sm:$0xf]
  %v119 = vld [vmem:[%s2 + $0x130] sm:$0xf]
  %v120 = vld [vmem:[%s2 + $0x134] sm:$0xf]
  %v121 = vld [vmem:[%s2 + $0x138] sm:$0xf]
  %v122 = vld [vmem:[%s2 + $0x13c] sm:$0xf]
  %v123 = vld [vmem:[%s2 + $0x140] sm:$0xf]
  %v124 = vld [vmem:[%s2 + $0x144] sm:$0xf]
  %v125 = vld [vmem:[%s2 + $0x148] sm:$0xf]
  %v126 = vld [vmem:[%s2 + $0x14c] sm:$0xf]
  %v127 = vld [vmem:[%s2 + $0x150] sm:$0xf]
  %v128 = vld [vmem:[%s2 + $0x154] sm:$0xf]
  %v129 = vld [vmem:[%s2 + $0x158] sm:$0xf]
  %v130 = vld [vmem:[%s2 + $0x15c] sm:$0xf]
  %v131 = vld [vmem:[%s2 + $0x160] sm:$0xf]
  %v132 = vld [vmem:[%s2 + $0x164] sm:$0xf]
  %v133 = vld [vmem:[%s2 + $0x168] sm:$0xf]
  %v134 = vld [vmem:[%s2 + $0x16c] sm:$0xf]
  %v135 = vld [vmem:[%s2 + $0x170] sm:$0xf]
  %v136 = vld [vmem:[%s2 + $0x174] sm:$0xf]
  %v137 = vld [vmem:[%s2 + $0x178] sm:$0xf]
  %v138 = vld [vmem:[%s2 + $0x17c] sm:$0xf]
  %v139 = vld [vmem:[%s2 + $0x180] sm:$0xf]
  %v140 = vld [vmem:[%s2 + $0x184] sm:$0xf]
  %v141 = vld [vmem:[%s2 + $0x188] sm:$0xf]
  %v142 = vld [vmem:[%s2 + $0x18c] sm:$0xf]
  %v143 = vld [vmem:[%s2 + $0x190] sm:$0xf]
  %v144 = vld [vmem:[%s2 + $0x194] sm:$0xf]
  %v145 = vld [vmem:[%s2 + $0x198] sm:$0xf]
  %v146 = vld [vmem:[%s2 + $0x19c] sm:$0xf]
  %v147 = vld [vmem:[%s2 + $0x1a0] sm:$0xf]
  %v148 = vld [vmem:[%s2 + $0x1a4] sm:$0xf]
  %v149 = vld [vmem:[%s2 + $0x1a8] sm:$0xf]
  %v150 = vld [vmem:[%s2 + $0x1ac] sm:$0xf]
  %v151 = vld [vmem:[%s2 + $0x1b0] sm:$0xf]
  %v152 = vld [vmem:[%s2 + $0x1b4] sm:$0xf]
  %v153 = vld [vmem:[%s2 + $0x1b8] sm:$0xf]
  %v154 = vld [vmem:[%s2 + $0x1bc] sm:$0xf]
  %v155 = vld [vmem:[%s2 + $0x1c0] sm:$0xf]
  %v156 = vld [vmem:[%s2 + $0x1c4] sm:$0xf]
  %v157 = vld [vmem:[%s2 + $0x1c8] sm:$0xf]
  %v158 = vld [vmem:[%s2 + $0x1cc] sm:$0xf]
  %v159 = vld [vmem:[%s2 + $0x1d0] sm:$0xf]
  %v160 = vld [vmem:[%s2 + $0x1d4] sm:$0xf]
  %v161 = vld [vmem:[%s2 + $0x1d8] sm:$0xf]
  %v162 = vld [vmem:[%s2 + $0x1dc] sm:$0xf]
  %v163 = vld [vmem:[%s2 + $0x1e0] sm:$0xf]
  %v164 = vld [vmem:[%s2 + $0x1e4] sm:$0xf]
  %v165 = vld [vmem:[%s2 + $0x1e8] sm:$0xf]
  %v166 = vld [vmem:[%s2 + $0x1ec] sm:$0xf]
  %v167 = vld [vmem:[%s2 + $0x1f0] sm:$0xf]
  %v168 = vld [vmem:[%s2 + $0x1f4] sm:$0xf]
  %v169 = vld [vmem:[%s2 + $0x1f8] sm:$0xf]
  %v170 = vld [vmem:[%s2 + $0x1fc] sm:$0xf]
  %v171 = vld [vmem:[%s2 + $0x200] sm:$0xf]
  %v172 = vld [vmem:[%s2 + $0x204] sm:$0xf]
  %v173 = vld [vmem:[%s3] sm:$0x1]
  %v175 = vlaneseq
  %v176 = vshrl.u32 %v175, 7
  %v177 = vsub.s32 0, %v176
  %v178 = vrot.slane %v173, %v177
  %v185 = vunpack.c.l.b16 %v38
  %v186 = vunpack.c.h.b16 %v38
  %v187 = vunpack.c.l.b16 %v39
  %v188 = vunpack.c.h.b16 %v39
  %v189 = vunpack.c.l.b16 %v40
  %v190 = vunpack.c.h.b16 %v40
  %v191 = vunpack.c.l.b16 %v41
  %v192 = vunpack.c.h.b16 %v41
  %v193 = vunpack.c.l.b16 %v42
  %v194 = vpack.c.b16 %v185, %v185
  %v195 = vpack.c.b16 %v186, %v186
  %v196 = vpack.c.b16 %v187, %v187
  %v197 = vpack.c.b16 %v188, %v188
  %v198 = vpack.c.b16 %v189, %v189
  %v199 = vpack.c.b16 %v190, %v190
  %v200 = vpack.c.b16 %v191, %v191
  %v201 = vpack.c.b16 %v192, %v192
  %v202 = vpack.c.b16 %v193, %v193
  %v341 = vunpack.c.l.b16 %v43
  %v342 = vunpack.c.l.b16 %v44
  %v343 = vunpack.c.l.b16 %v45
  %v344 = vunpack.c.l.b16 %v46
  %v345 = vunpack.c.l.b16 %v47
  %v346 = vunpack.c.l.b16 %v48
  %v347 = vunpack.c.l.b16 %v49
  %v348 = vunpack.c.l.b16 %v50
  %v349 = vunpack.c.l.b16 %v51
  %v350 = vunpack.c.l.b16 %v52
  %v351 = vunpack.c.l.b16 %v53
  %v352 = vunpack.c.l.b16 %v54
  %v353 = vunpack.c.l.b16 %v55
  %v354 = vunpack.c.l.b16 %v56
  %v355 = vunpack.c.l.b16 %v57
  %v356 = vunpack.c.l.b16 %v58
  %v357 = vunpack.c.l.b16 %v59
  %v358 = vunpack.c.l.b16 %v60
  %v359 = vunpack.c.l.b16 %v61
  %v360 = vunpack.c.l.b16 %v62
  %v361 = vunpack.c.l.b16 %v63
  %v362 = vunpack.c.l.b16 %v64
  %v363 = vunpack.c.l.b16 %v65
  %v364 = vunpack.c.l.b16 %v66
  %v365 = vunpack.c.l.b16 %v67
  %v366 = vunpack.c.l.b16 %v68
  %v367 = vunpack.c.l.b16 %v69
  %v368 = vunpack.c.l.b16 %v70
  %v369 = vunpack.c.l.b16 %v71
  %v370 = vunpack.c.l.b16 %v72
  %v371 = vunpack.c.l.b16 %v73
  %v372 = vunpack.c.l.b16 %v74
  %v373 = vunpack.c.l.b16 %v75
  %v374 = vunpack.c.l.b16 %v76
  %v375 = vunpack.c.l.b16 %v77
  %v376 = vunpack.c.l.b16 %v78
  %v377 = vunpack.c.l.b16 %v79
  %v378 = vunpack.c.l.b16 %v80
  %v379 = vunpack.c.l.b16 %v81
  %v380 = vunpack.c.l.b16 %v82
  %v381 = vunpack.c.l.b16 %v83
  %v382 = vunpack.c.l.b16 %v84
  %v383 = vunpack.c.l.b16 %v85
  %v384 = vunpack.c.l.b16 %v86
  %v385 = vunpack.c.l.b16 %v87
  %v386 = vunpack.c.l.b16 %v88
  %v387 = vunpack.c.l.b16 %v89
  %v388 = vunpack.c.l.b16 %v90
  %v389 = vunpack.c.l.b16 %v91
  %v390 = vunpack.c.l.b16 %v92
  %v391 = vunpack.c.l.b16 %v93
  %v392 = vunpack.c.l.b16 %v94
  %v393 = vunpack.c.l.b16 %v95
  %v394 = vunpack.c.l.b16 %v96
  %v395 = vunpack.c.l.b16 %v97
  %v396 = vunpack.c.l.b16 %v98
  %v397 = vunpack.c.l.b16 %v99
  %v398 = vunpack.c.l.b16 %v100
  %v399 = vunpack.c.l.b16 %v101
  %v400 = vunpack.c.l.b16 %v102
  %v401 = vunpack.c.l.b16 %v103
  %v402 = vunpack.c.l.b16 %v104
  %v403 = vunpack.c.l.b16 %v105
  %v404 = vunpack.c.l.b16 %v106
  %v405 = vunpack.c.l.b16 %v107
  %v406 = vunpack.c.l.b16 %v108
  %v407 = vunpack.c.l.b16 %v109
  %v408 = vunpack.c.l.b16 %v110
  %v409 = vunpack.c.l.b16 %v111
  %v410 = vunpack.c.l.b16 %v112
  %v411 = vunpack.c.l.b16 %v113
  %v412 = vunpack.c.l.b16 %v114
  %v413 = vunpack.c.l.b16 %v115
  %v414 = vunpack.c.l.b16 %v116
  %v415 = vunpack.c.l.b16 %v117
  %v416 = vunpack.c.l.b16 %v118
  %v417 = vunpack.c.l.b16 %v119
  %v418 = vunpack.c.l.b16 %v120
  %v419 = vunpack.c.l.b16 %v121
  %v420 = vunpack.c.l.b16 %v122
  %v421 = vunpack.c.l.b16 %v123
  %v422 = vunpack.c.l.b16 %v124
  %v423 = vunpack.c.l.b16 %v125
  %v424 = vunpack.c.l.b16 %v126
  %v425 = vunpack.c.l.b16 %v127
  %v426 = vunpack.c.l.b16 %v128
  %v427 = vunpack.c.l.b16 %v129
  %v428 = vunpack.c.l.b16 %v130
  %v429 = vunpack.c.l.b16 %v131
  %v430 = vunpack.c.l.b16 %v132
  %v431 = vunpack.c.l.b16 %v133
  %v432 = vunpack.c.l.b16 %v134
  %v433 = vunpack.c.l.b16 %v135
  %v434 = vunpack.c.l.b16 %v136
  %v435 = vunpack.c.l.b16 %v137
  %v436 = vunpack.c.l.b16 %v138
  %v437 = vunpack.c.l.b16 %v139
  %v438 = vunpack.c.l.b16 %v140
  %v439 = vunpack.c.l.b16 %v141
  %v440 = vunpack.c.l.b16 %v142
  %v441 = vunpack.c.l.b16 %v143
  %v442 = vunpack.c.l.b16 %v144
  %v443 = vunpack.c.l.b16 %v145
  %v444 = vunpack.c.l.b16 %v146
  %v445 = vunpack.c.l.b16 %v147
  %v446 = vunpack.c.l.b16 %v148
  %v447 = vunpack.c.l.b16 %v149
  %v448 = vunpack.c.l.b16 %v150
  %v449 = vunpack.c.l.b16 %v151
  %v450 = vunpack.c.l.b16 %v152
  %v451 = vunpack.c.l.b16 %v153
  %v452 = vunpack.c.l.b16 %v154
  %v453 = vunpack.c.l.b16 %v155
  %v454 = vunpack.c.l.b16 %v156
  %v455 = vunpack.c.l.b16 %v157
  %v456 = vunpack.c.l.b16 %v158
  %v457 = vunpack.c.l.b16 %v159
  %v458 = vunpack.c.l.b16 %v160
  %v459 = vunpack.c.l.b16 %v161
  %v460 = vunpack.c.l.b16 %v162
  %v461 = vunpack.c.l.b16 %v163
  %v462 = vunpack.c.l.b16 %v164
  %v463 = vunpack.c.l.b16 %v165
  %v464 = vunpack.c.l.b16 %v166
  %v465 = vunpack.c.l.b16 %v167
  %v466 = vunpack.c.l.b16 %v168
  %v467 = vunpack.c.l.b16 %v169
  %v468 = vunpack.c.l.b16 %v170
  %v469 = vunpack.c.l.b16 %v171
  %v470 = vunpack.c.l.b16 %v172
  %v471 = vpack.c.b16 %v342, %v341
  %v472 = vpack.c.b16 %v344, %v343
  %v473 = vpack.c.b16 %v346, %v345
  %v474 = vpack.c.b16 %v348, %v347
  %v475 = vpack.c.b16 %v350, %v349
  %v476 = vpack.c.b16 %v352, %v351
  %v477 = vpack.c.b16 %v354, %v353
  %v478 = vpack.c.b16 %v356, %v355
  %v479 = vpack.c.b16 %v358, %v357
  %v480 = vpack.c.b16 %v360, %v359
  %v481 = vpack.c.b16 %v362, %v361
  %v482 = vpack.c.b16 %v364, %v363
  %v483 = vpack.c.b16 %v366, %v365
  %v484 = vpack.c.b16 %v368, %v367
  %v485 = vpack.c.b16 %v370, %v369
  %v486 = vpack.c.b16 %v372, %v371
  %v487 = vpack.c.b16 %v374, %v373
  %v488 = vpack.c.b16 %v376, %v375
  %v489 = vpack.c.b16 %v378, %v377
  %v490 = vpack.c.b16 %v380, %v379
  %v491 = vpack.c.b16 %v382, %v381
  %v492 = vpack.c.b16 %v384, %v383
  %v493 = vpack.c.b16 %v386, %v385
  %v494 = vpack.c.b16 %v388, %v387
  %v495 = vpack.c.b16 %v390, %v389
  %v496 = vpack.c.b16 %v392, %v391
  %v497 = vpack.c.b16 %v394, %v393
  %v498 = vpack.c.b16 %v396, %v395
  %v499 = vpack.c.b16 %v398, %v397
  %v500 = vpack.c.b16 %v400, %v399
  %v501 = vpack.c.b16 %v402, %v401
  %v502 = vpack.c.b16 %v404, %v403
  %v503 = vpack.c.b16 %v406, %v405
  %v504 = vpack.c.b16 %v408, %v407
  %v505 = vpack.c.b16 %v410, %v409
  %v506 = vpack.c.b16 %v412, %v411
  %v507 = vpack.c.b16 %v414, %v413
  %v508 = vpack.c.b16 %v416, %v415
  %v509 = vpack.c.b16 %v418, %v417
  %v510 = vpack.c.b16 %v420, %v419
  %v511 = vpack.c.b16 %v422, %v421
  %v512 = vpack.c.b16 %v424, %v423
  %v513 = vpack.c.b16 %v426, %v425
  %v514 = vpack.c.b16 %v428, %v427
  %v515 = vpack.c.b16 %v430, %v429
  %v516 = vpack.c.b16 %v432, %v431
  %v517 = vpack.c.b16 %v434, %v433
  %v518 = vpack.c.b16 %v436, %v435
  %v519 = vpack.c.b16 %v438, %v437
  %v520 = vpack.c.b16 %v440, %v439
  %v521 = vpack.c.b16 %v442, %v441
  %v522 = vpack.c.b16 %v444, %v443
  %v523 = vpack.c.b16 %v446, %v445
  %v524 = vpack.c.b16 %v448, %v447
  %v525 = vpack.c.b16 %v450, %v449
  %v526 = vpack.c.b16 %v452, %v451
  %v527 = vpack.c.b16 %v454, %v453
  %v528 = vpack.c.b16 %v456, %v455
  %v529 = vpack.c.b16 %v458, %v457
  %v530 = vpack.c.b16 %v460, %v459
  %v531 = vpack.c.b16 %v462, %v461
  %v532 = vpack.c.b16 %v464, %v463
  %v533 = vpack.c.b16 %v466, %v465
  %v534 = vpack.c.b16 %v468, %v467
  %v535 = vpack.c.b16 %v470, %v469
  %vm601 = vcmask 130048
  %v603 = vsel %vm601, %v202, 0
  %605 = vmatprep.subr.bf16.mxu0 0
  %606 = vmatpush1.bf16.msra.mxu0 %v471
  %607 = vmatprep.subr.bf16.mxu0 0
  %608 = vmatpush1.bf16.msra.mxu0 %v472
  %609 = vmatprep.subr.bf16.mxu0 0
  %610 = vmatpush1.bf16.msra.mxu0 %v473
  %611 = vmatprep.subr.bf16.mxu0 0
  %612 = vmatpush1.bf16.msra.mxu0 %v474
  %613 = vmatprep.subr.bf16.mxu0 0
  %614 = vmatpush1.bf16.msra.mxu0 %v475
  %615 = vmatprep.subr.bf16.mxu0 0
  %616 = vmatpush1.bf16.msra.mxu0 %v476
  %617 = vmatprep.subr.bf16.mxu0 0
  %618 = vmatpush1.bf16.msra.mxu0 %v477
  %619 = vmatprep.subr.bf16.mxu0 0
  %620 = vmatpush1.bf16.msra.mxu0 %v478
  %621 = vmatprep.subr.bf16.mxu0 0
  %622 = vmatpush1.bf16.msra.mxu0 %v479
  %623 = vmatprep.subr.bf16.mxu0 0
  %624 = vmatpush1.bf16.msra.mxu0 %v480
  %625 = vmatprep.subr.bf16.mxu0 0
  %626 = vmatpush1.bf16.msra.mxu0 %v481
  %627 = vmatprep.subr.bf16.mxu0 0
  %628 = vmatpush1.bf16.msra.mxu0 %v482
  %629 = vmatprep.subr.bf16.mxu0 0
  %630 = vmatpush1.bf16.msra.mxu0 %v483
  %631 = vmatprep.subr.bf16.mxu0 0
  %632 = vmatpush1.bf16.msra.mxu0 %v484
  %633 = vmatprep.subr.bf16.mxu0 0
  %634 = vmatpush1.bf16.msra.mxu0 %v485
  %635 = vmatprep.subr.bf16.mxu0 0
  %636 = vmatpush1.bf16.msra.mxu0 %v486
  %637 = vmatprep.mubr.bf16.mxu0 %v195
  %638 = vmatmul.mubr.bf16.gmra.mrb[0].mxu0 %v194
  %v639 = vpop.f32.mrb[0].mxu0
  %v640 = vadd.f32 %v178, %v639
  %v641 = vpop.f32.mrb[0].mxu0
  %v642 = vpop.f32.mrb[0].mxu0
  %v643 = vpop.f32.mrb[0].mxu0
  %644 = vdwg.mxu0
  %645 = vmatprep.subr.bf16.mxu0 0
  %646 = vmatpush1.bf16.msra.mxu0 %v487
  %647 = vmatprep.subr.bf16.mxu0 0
  %648 = vmatpush1.bf16.msra.mxu0 %v488
  %649 = vmatprep.subr.bf16.mxu0 0
  %650 = vmatpush1.bf16.msra.mxu0 %v489
  %651 = vmatprep.subr.bf16.mxu0 0
  %652 = vmatpush1.bf16.msra.mxu0 %v490
  %653 = vmatprep.subr.bf16.mxu0 0
  %654 = vmatpush1.bf16.msra.mxu0 %v491
  %655 = vmatprep.subr.bf16.mxu0 0
  %656 = vmatpush1.bf16.msra.mxu0 %v492
  %657 = vmatprep.subr.bf16.mxu0 0
  %658 = vmatpush1.bf16.msra.mxu0 %v493
  %659 = vmatprep.subr.bf16.mxu0 0
  %660 = vmatpush1.bf16.msra.mxu0 %v494
  %661 = vmatprep.subr.bf16.mxu0 0
  %662 = vmatpush1.bf16.msra.mxu0 %v495
  %663 = vmatprep.subr.bf16.mxu0 0
  %664 = vmatpush1.bf16.msra.mxu0 %v496
  %665 = vmatprep.subr.bf16.mxu0 0
  %666 = vmatpush1.bf16.msra.mxu0 %v497
  %667 = vmatprep.subr.bf16.mxu0 0
  %668 = vmatpush1.bf16.msra.mxu0 %v498
  %669 = vmatprep.subr.bf16.mxu0 0
  %670 = vmatpush1.bf16.msra.mxu0 %v499
  %671 = vmatprep.subr.bf16.mxu0 0
  %672 = vmatpush1.bf16.msra.mxu0 %v500
  %673 = vmatprep.subr.bf16.mxu0 0
  %674 = vmatpush1.bf16.msra.mxu0 %v501
  %675 = vmatprep.subr.bf16.mxu0 0
  %676 = vmatpush1.bf16.msra.mxu0 %v502
  %677 = vmatprep.mubr.bf16.mxu0 %v197
  %678 = vmatmul.mubr.bf16.gmra.mrb[0].mxu0 %v196
  %v679 = vpop.f32.mrb[0].mxu0
  %v680 = vadd.f32 %v640, %v679
  %v681 = vpop.f32.mrb[0].mxu0
  %v682 = vpop.f32.mrb[0].mxu0
  %v683 = vpop.f32.mrb[0].mxu0
  %684 = vdwg.mxu0
  %685 = vmatprep.subr.bf16.mxu0 0
  %686 = vmatpush1.bf16.msra.mxu0 %v503
  %687 = vmatprep.subr.bf16.mxu0 0
  %688 = vmatpush1.bf16.msra.mxu0 %v504
  %689 = vmatprep.subr.bf16.mxu0 0
  %690 = vmatpush1.bf16.msra.mxu0 %v505
  %691 = vmatprep.subr.bf16.mxu0 0
  %692 = vmatpush1.bf16.msra.mxu0 %v506
  %693 = vmatprep.subr.bf16.mxu0 0
  %694 = vmatpush1.bf16.msra.mxu0 %v507
  %695 = vmatprep.subr.bf16.mxu0 0
  %696 = vmatpush1.bf16.msra.mxu0 %v508
  %697 = vmatprep.subr.bf16.mxu0 0
  %698 = vmatpush1.bf16.msra.mxu0 %v509
  %699 = vmatprep.subr.bf16.mxu0 0
  %700 = vmatpush1.bf16.msra.mxu0 %v510
  %701 = vmatprep.subr.bf16.mxu0 0
  %702 = vmatpush1.bf16.msra.mxu0 %v511
  %703 = vmatprep.subr.bf16.mxu0 0
  %704 = vmatpush1.bf16.msra.mxu0 %v512
  %705 = vmatprep.subr.bf16.mxu0 0
  %706 = vmatpush1.bf16.msra.mxu0 %v513
  %707 = vmatprep.subr.bf16.mxu0 0
  %708 = vmatpush1.bf16.msra.mxu0 %v514
  %709 = vmatprep.subr.bf16.mxu0 0
  %710 = vmatpush1.bf16.msra.mxu0 %v515
  %711 = vmatprep.subr.bf16.mxu0 0
  %712 = vmatpush1.bf16.msra.mxu0 %v516
  %713 = vmatprep.subr.bf16.mxu0 0
  %714 = vmatpush1.bf16.msra.mxu0 %v517
  %715 = vmatprep.subr.bf16.mxu0 0
  %716 = vmatpush1.bf16.msra.mxu0 %v518
  %717 = vmatprep.mubr.bf16.mxu0 %v199
  %718 = vmatmul.mubr.bf16.gmra.mrb[0].mxu0 %v198
  %v719 = vpop.f32.mrb[0].mxu0
  %v720 = vadd.f32 %v680, %v719
  %v721 = vpop.f32.mrb[0].mxu0
  %v722 = vpop.f32.mrb[0].mxu0
  %v723 = vpop.f32.mrb[0].mxu0
  %724 = vdwg.mxu0
  %725 = vmatprep.subr.bf16.mxu0 0
  %726 = vmatpush1.bf16.msra.mxu0 %v519
  %727 = vmatprep.subr.bf16.mxu0 0
  %728 = vmatpush1.bf16.msra.mxu0 %v520
  %729 = vmatprep.subr.bf16.mxu0 0
  %730 = vmatpush1.bf16.msra.mxu0 %v521
  %731 = vmatprep.subr.bf16.mxu0 0
  %732 = vmatpush1.bf16.msra.mxu0 %v522
  %733 = vmatprep.subr.bf16.mxu0 0
  %734 = vmatpush1.bf16.msra.mxu0 %v523
  %735 = vmatprep.subr.bf16.mxu0 0
  %736 = vmatpush1.bf16.msra.mxu0 %v524
  %737 = vmatprep.subr.bf16.mxu0 0
  %738 = vmatpush1.bf16.msra.mxu0 %v525
  %739 = vmatprep.subr.bf16.mxu0 0
  %740 = vmatpush1.bf16.msra.mxu0 %v526
  %741 = vmatprep.subr.bf16.mxu0 0
  %742 = vmatpush1.bf16.msra.mxu0 %v527
  %743 = vmatprep.subr.bf16.mxu0 0
  %744 = vmatpush1.bf16.msra.mxu0 %v528
  %745 = vmatprep.subr.bf16.mxu0 0
  %746 = vmatpush1.bf16.msra.mxu0 %v529
  %747 = vmatprep.subr.bf16.mxu0 0
  %748 = vmatpush1.bf16.msra.mxu0 %v530
  %749 = vmatprep.subr.bf16.mxu0 0
  %750 = vmatpush1.bf16.msra.mxu0 %v531
  %751 = vmatprep.subr.bf16.mxu0 0
  %752 = vmatpush1.bf16.msra.mxu0 %v532
  %753 = vmatprep.subr.bf16.mxu0 0
  %754 = vmatpush1.bf16.msra.mxu0 %v533
  %755 = vmatprep.subr.bf16.mxu0 0
  %756 = vmatpush1.bf16.msra.mxu0 %v534
  %757 = vmatprep.mubr.bf16.mxu0 %v201
  %758 = vmatmul.mubr.bf16.gmra.mrb[0].mxu0 %v200
  %v759 = vpop.f32.mrb[0].mxu0
  %v760 = vadd.f32 %v720, %v759
  %v761 = vpop.f32.mrb[0].mxu0
  %v762 = vpop.f32.mrb[0].mxu0
  %v763 = vpop.f32.mrb[0].mxu0
  %764 = vdwg.mxu0
  %765 = vmatprep.subr.bf16.mxu0 0
  %766 = vmatpush1.bf16.msra.mxu0 %v535
  %767 = vmatprep.subr.bf16.mxu0 0
  %768 = vmatpush1.bf16.msra.mxu0 0
  %769 = vmatprep.subr.bf16.mxu0 0
  %770 = vmatpush1.bf16.msra.mxu0 0
  %771 = vmatprep.subr.bf16.mxu0 0
  %772 = vmatpush1.bf16.msra.mxu0 0
  %773 = vmatprep.subr.bf16.mxu0 0
  %774 = vmatpush1.bf16.msra.mxu0 0
  %775 = vmatprep.subr.bf16.mxu0 0
  %776 = vmatpush1.bf16.msra.mxu0 0
  %777 = vmatprep.subr.bf16.mxu0 0
  %778 = vmatpush1.bf16.msra.mxu0 0
  %779 = vmatprep.subr.bf16.mxu0 0
  %780 = vmatpush1.bf16.msra.mxu0 0
  %781 = vmatprep.subr.bf16.mxu0 0
  %782 = vmatpush1.bf16.msra.mxu0 0
  %783 = vmatprep.subr.bf16.mxu0 0
  %784 = vmatpush1.bf16.msra.mxu0 0
  %785 = vmatprep.subr.bf16.mxu0 0
  %786 = vmatpush1.bf16.msra.mxu0 0
  %787 = vmatprep.subr.bf16.mxu0 0
  %788 = vmatpush1.bf16.msra.mxu0 0
  %789 = vmatprep.subr.bf16.mxu0 0
  %790 = vmatpush1.bf16.msra.mxu0 0
  %791 = vmatprep.subr.bf16.mxu0 0
  %792 = vmatpush1.bf16.msra.mxu0 0
  %793 = vmatprep.subr.bf16.mxu0 0
  %794 = vmatpush1.bf16.msra.mxu0 0
  %795 = vmatprep.subr.bf16.mxu0 0
  %796 = vmatpush1.bf16.msra.mxu0 0
  %797 = vmatprep.mubr.bf16.mxu0 0
  %798 = vmatmul.mubr.bf16.gmra.mrb[0].mxu0 %v603
  %v799 = vpop.f32.mrb[0].mxu0
  %v800 = vadd.f32 %v760, %v799
  %v801 = vpop.f32.mrb[0].mxu0
  %v802 = vpop.f32.mrb[0].mxu0
  %v803 = vpop.f32.mrb[0].mxu0
  %804 = vdwg.mxu0
  %v805 = vmax.f32 %v800, 0.0
  %v806 = vpack.c.bf16 %v805, %v805
  %v807 = vld [vmem:[%s4] sm:$0xf]
  %v808 = vld [vmem:[%s4 + $0x4] sm:$0xf]
  %v809 = vld [vmem:[%s4 + $0x8] sm:$0xf]
  %v810 = vld [vmem:[%s4 + $0xc] sm:$0xf]
  %v811 = vld [vmem:[%s4 + $0x10] sm:$0xf]
  %v812 = vld [vmem:[%s4 + $0x14] sm:$0xf]
  %v813 = vld [vmem:[%s4 + $0x18] sm:$0xf]
  %v814 = vld [vmem:[%s4 + $0x1c] sm:$0xf]
  %v815 = vld [vmem:[%s5] sm:$0x1]
  %v817 = vlaneseq
  %v818 = vshrl.u32 %v817, 7
  %v819 = vsub.s32 0, %v818
  %v820 = vrot.slane %v815, %v819
  %v830 = vunpack.c.l.b16 %v807
  %v831 = vunpack.c.l.b16 %v808
  %v832 = vunpack.c.l.b16 %v809
  %v833 = vunpack.c.l.b16 %v810
  %v834 = vunpack.c.l.b16 %v811
  %v835 = vunpack.c.l.b16 %v812
  %v836 = vunpack.c.l.b16 %v813
  %v837 = vunpack.c.l.b16 %v814
  %v838 = vpack.c.b16 %v831, %v830
  %v839 = vpack.c.b16 %v833, %v832
  %v840 = vpack.c.b16 %v835, %v834
  %v841 = vpack.c.b16 %v837, %v836
  %vm846 = vcmask 523264
  %v848 = vsel %vm846, %v806, 0
  %850 = vmatprep.subr.bf16.mxu0 0
  %851 = vmatpush1.bf16.msra.mxu0 %v838
  %852 = vmatprep.subr.bf16.mxu0 0
  %853 = vmatpush1.bf16.msra.mxu0 %v839
  %854 = vmatprep.subr.bf16.mxu0 0
  %855 = vmatpush1.bf16.msra.mxu0 %v840
  %856 = vmatprep.subr.bf16.mxu0 0
  %857 = vmatpush1.bf16.msra.mxu0 %v841
  %858 = vmatprep.subr.bf16.mxu0 0
  %859 = vmatpush1.bf16.msra.mxu0 0
  %860 = vmatprep.subr.bf16.mxu0 0
  %861 = vmatpush1.bf16.msra.mxu0 0
  %862 = vmatprep.subr.bf16.mxu0 0
  %863 = vmatpush1.bf16.msra.mxu0 0
  %864 = vmatprep.subr.bf16.mxu0 0
  %865 = vmatpush1.bf16.msra.mxu0 0
  %866 = vmatprep.subr.bf16.mxu0 0
  %867 = vmatpush1.bf16.msra.mxu0 0
  %868 = vmatprep.subr.bf16.mxu0 0
  %869 = vmatpush1.bf16.msra.mxu0 0
  %870 = vmatprep.subr.bf16.mxu0 0
  %871 = vmatpush1.bf16.msra.mxu0 0
  %872 = vmatprep.subr.bf16.mxu0 0
  %873 = vmatpush1.bf16.msra.mxu0 0
  %874 = vmatprep.subr.bf16.mxu0 0
  %875 = vmatpush1.bf16.msra.mxu0 0
  %876 = vmatprep.subr.bf16.mxu0 0
  %877 = vmatpush1.bf16.msra.mxu0 0
  %878 = vmatprep.subr.bf16.mxu0 0
  %879 = vmatpush1.bf16.msra.mxu0 0
  %880 = vmatprep.subr.bf16.mxu0 0
  %881 = vmatpush1.bf16.msra.mxu0 0
  %882 = vmatprep.mubr.bf16.mxu0 0
  %883 = vmatmul.mubr.bf16.gmra.mrb[0].mxu0 %v848
  %v884 = vpop.f32.mrb[0].mxu0
  %v885 = vadd.f32 %v820, %v884
  %v886 = vpop.f32.mrb[0].mxu0
  %v887 = vpop.f32.mrb[0].mxu0
  %v888 = vpop.f32.mrb[0].mxu0
  %889 = vdwg.mxu0
  %v890 = vld [vmem:[%s1] sm:$0xff]
  %v891 = vpack.c.bf16 %v890, %v890
  %v892 = vld [vmem:[%s6] sm:$0xf]
  %v893 = vld [vmem:[%s6 + $0x4] sm:$0xf]
  %v894 = vld [vmem:[%s6 + $0x8] sm:$0xf]
  %v895 = vld [vmem:[%s6 + $0xc] sm:$0xf]
  %v900 = vunpack.c.l.b16 %v892
  %v901 = vunpack.c.l.b16 %v893
  %v902 = vunpack.c.l.b16 %v894
  %v903 = vunpack.c.l.b16 %v895
  %v904 = vpack.c.b16 %v901, %v900
  %v905 = vpack.c.b16 %v903, %v902
  %vm908 = vcmask 261120
  %v910 = vsel %vm908, %v891, 0
  %912 = vmatprep.subr.bf16.mxu0 0
  %913 = vmatpush1.bf16.msra.mxu0 %v904
  %914 = vmatprep.subr.bf16.mxu0 0
  %915 = vmatpush1.bf16.msra.mxu0 %v905
  %916 = vmatprep.subr.bf16.mxu0 0
  %917 = vmatpush1.bf16.msra.mxu0 0
  %918 = vmatprep.subr.bf16.mxu0 0
  %919 = vmatpush1.bf16.msra.mxu0 0
  %920 = vmatprep.subr.bf16.mxu0 0
  %921 = vmatpush1.bf16.msra.mxu0 0
  %922 = vmatprep.subr.bf16.mxu0 0
  %923 = vmatpush1.bf16.msra.mxu0 0
  %924 = vmatprep.subr.bf16.mxu0 0
  %925 = vmatpush1.bf16.msra.mxu0 0
  %926 = vmatprep.subr.bf16.mxu0 0
  %927 = vmatpush1.bf16.msra.mxu0 0
  %928 = vmatprep.subr.bf16.mxu0 0
  %929 = vmatpush1.bf16.msra.mxu0 0
  %930 = vmatprep.subr.bf16.mxu0 0
  %931 = vmatpush1.bf16.msra.mxu0 0
  %932 = vmatprep.subr.bf16.mxu0 0
  %933 = vmatpush1.bf16.msra.mxu0 0
  %934 = vmatprep.subr.bf16.mxu0 0
  %935 = vmatpush1.bf16.msra.mxu0 0
  %936 = vmatprep.subr.bf16.mxu0 0
  %937 = vmatpush1.bf16.msra.mxu0 0
  %938 = vmatprep.subr.bf16.mxu0 0
  %939 = vmatpush1.bf16.msra.mxu0 0
  %940 = vmatprep.subr.bf16.mxu0 0
  %941 = vmatpush1.bf16.msra.mxu0 0
  %942 = vmatprep.subr.bf16.mxu0 0
  %943 = vmatpush1.bf16.msra.mxu0 0
  %944 = vmatprep.mubr.bf16.mxu0 0
  %945 = vmatmul.mubr.bf16.gmra.mrb[0].mxu0 %v910
  %v946 = vpop.f32.mrb[0].mxu0
  %v947 = vadd.f32 0.0, %v946
  %v948 = vpop.f32.mrb[0].mxu0
  %v949 = vpop.f32.mrb[0].mxu0
  %v950 = vpop.f32.mrb[0].mxu0
  %951 = vdwg.mxu0
  %v952 = vld [vmem:[%s7] sm:$0x1]
  %v953 = vadd.f32 %v885, %v947
  %v954 = vxor.u32 %v953, 2147483648
  %v955 = vmul.f32 %v954, 1.442695
  %v956 = vpow.pop %v955
  %v957 = vadd.f32 %v956, 1.0
  %v958 = vrcp.pop %v957
  %v959 = vmul.f32 1.0, %v958
  %v961 = vlaneseq
  %v962 = vshrl.u32 %v961, 7
  %v963 = vsub.s32 0, %v962
  %v964 = vrot.slane %v952, %v963
  %965 = vrot.lane.b32.xlu0 %v964, 64
  %v966 = vpop.permute.xlu0 %965
  %v968 = vadd.f32 %v947, %v966
  %970 = vrot.lane.b32.xlu0 %v968, 64
  %v971 = vpop.permute.xlu0 %970
  %v973 = vmul.f32 %v959, %v971
  %975 = vrot.lane.b32.xlu0 %v973, 64
  %v976 = vpop.permute.xlu0 %975
  %v978 = vadd.f32 %v885, %v976
  %v979 = vtanh.pop %v978
  %v980 = vsub.f32 1.0, %v959
  %982 = vrot.lane.b32.xlu0 %v979, 96
  %v983 = vpop.permute.xlu0 %982
  %v985 = vmul.f32 %v980, %v983
  %987 = vrot.lane.b32.xlu0 %v890, 32
  %v988 = vpop.permute.xlu0 %987
  %v990 = vmul.f32 %v959, %v988
  %v991 = vadd.f32 %v985, %v990
  %v992 = vld [vmem:[%s8] sm:$0xf]
  %v993 = vld [vmem:[%s8 + $0x4] sm:$0xf]
  %v994 = vld [vmem:[%s8 + $0x8] sm:$0xf]
  %v995 = vld [vmem:[%s8 + $0xc] sm:$0xf]
  %v996 = vld [vmem:[%s9] sm:$0x1]
  %v997 = vpack.c.bf16 %v991, %v991
  %v999 = vlaneseq
  %v1000 = vshrl.u32 %v999, 7
  %v1001 = vsub.s32 0, %v1000
  %v1002 = vrot.slane %v996, %v1001
  %1005 = vrot.lane.b32.xlu0 %v997, 96
  %v1006 = vpop.permute.xlu0 %1005
  %v1011 = vunpack.c.l.b16 %v992
  %v1012 = vunpack.c.l.b16 %v993
  %v1013 = vunpack.c.l.b16 %v994
  %v1014 = vunpack.c.l.b16 %v995
  %v1015 = vpack.c.b16 %v1012, %v1011
  %v1016 = vpack.c.b16 %v1014, %v1013
  %v1020 = vsel %vm908, %v1006, 0
  %1022 = vmatprep.subr.bf16.mxu0 0
  %1023 = vmatpush1.bf16.msra.mxu0 %v1015
  %1024 = vmatprep.subr.bf16.mxu0 0
  %1025 = vmatpush1.bf16.msra.mxu0 %v1016
  %1026 = vmatprep.subr.bf16.mxu0 0
  %1027 = vmatpush1.bf16.msra.mxu0 0
  %1028 = vmatprep.subr.bf16.mxu0 0
  %1029 = vmatpush1.bf16.msra.mxu0 0
  %1030 = vmatprep.subr.bf16.mxu0 0
  %1031 = vmatpush1.bf16.msra.mxu0 0
  %1032 = vmatprep.subr.bf16.mxu0 0
  %1033 = vmatpush1.bf16.msra.mxu0 0
  %1034 = vmatprep.subr.bf16.mxu0 0
  %1035 = vmatpush1.bf16.msra.mxu0 0
  %1036 = vmatprep.subr.bf16.mxu0 0
  %1037 = vmatpush1.bf16.msra.mxu0 0
  %1038 = vmatprep.subr.bf16.mxu0 0
  %1039 = vmatpush1.bf16.msra.mxu0 0
  %1040 = vmatprep.subr.bf16.mxu0 0
  %1041 = vmatpush1.bf16.msra.mxu0 0
  %1042 = vmatprep.subr.bf16.mxu0 0
  %1043 = vmatpush1.bf16.msra.mxu0 0
  %1044 = vmatprep.subr.bf16.mxu0 0
  %1045 = vmatpush1.bf16.msra.mxu0 0
  %1046 = vmatprep.subr.bf16.mxu0 0
  %1047 = vmatpush1.bf16.msra.mxu0 0
  %1048 = vmatprep.subr.bf16.mxu0 0
  %1049 = vmatpush1.bf16.msra.mxu0 0
  %1050 = vmatprep.subr.bf16.mxu0 0
  %1051 = vmatpush1.bf16.msra.mxu0 0
  %1052 = vmatprep.subr.bf16.mxu0 0
  %1053 = vmatpush1.bf16.msra.mxu0 0
  %1054 = vmatprep.mubr.bf16.mxu0 0
  %1055 = vmatmul.mubr.bf16.gmra.mrb[0].mxu0 %v1020
  %v1056 = vpop.f32.mrb[0].mxu0
  %v1057 = vadd.f32 %v1002, %v1056
  %v1058 = vpop.f32.mrb[0].mxu0
  %v1059 = vpop.f32.mrb[0].mxu0
  %v1060 = vpop.f32.mrb[0].mxu0
  %1061 = vdwg.mxu0
  %v1062 = vtanh.pop %v1057
  %1063 = vst [vmem:[%s10] sm:$0xff] %v1062
  %1065 = vrot.lane.b32.xlu0 %v991, 96
  %v1066 = vpop.permute.xlu0 %1065
  %1068 = vst.msk [vmem:[%s11] sm:$0xff] %vm908, %v1066
  // Predicated region
  $region42: #{policy_step.1} parent=0 // pred_check
    _
  $region43: #{policy_step.1} parent=0 // pred_check_branch
    %1070 = sbr.rel (0) target = $region45
  $region44: #{policy_step.1} parent=0 // pred_region
    _
  $region45: #{policy_step.1} parent=0 // pred_fallthru
    _
  // Predicated region
  $region46: #{policy_step.1} parent=0 // pred_check
    _
  $region47: #{policy_step.1} parent=0 // pred_check_branch
    %1072 = sbr.rel (0) target = $region49
  $region48: #{policy_step.1} parent=0 // pred_region
    _
  $region49: #{policy_step.1} parent=0 // pred_fallthru
    _
  // Predicated region
  $region50: #{policy_step.1} parent=0 // pred_check
    _
  $region51: #{policy_step.1} parent=0 // pred_check_branch
    %1074 = sbr.rel (0) target = $region53
  $region52: #{policy_step.1} parent=0 // pred_region
    _
  $region53: #{policy_step.1} parent=0 // pred_fallthru
    _
  // Predicated region
  $region54: #{policy_step.1} parent=0 // pred_check
    _
  $region55: #{policy_step.1} parent=0 // pred_check_branch
    %1076 = sbr.rel (0) target = $region57
  $region56: #{policy_step.1} parent=0 // pred_region
    _
  $region57: #{policy_step.1} parent=0 // pred_fallthru
    _

</llo_original>
